<compile_context>
chip_gen: v7x
topology: tpu7x:2x2x1
jax: 0.10.0
libtpu: 0.0.40
codegen_flags: <defaults>
</compile_context>

<pallas_src>
import jax
import jax.numpy as jnp
from jax import lax
from jax.experimental import pallas as pl
from jax.experimental.pallas import tpu as pltpu


def _round_up(x, m):
    return pl.cdiv(x, m) * m


# ----------------------------------------------------------------------------
# Kernel 1: KG aggregation  (scatter_mean via streamed one-hot MXU matmul)
# ----------------------------------------------------------------------------
def _entity_agg_kernel(head_ref, neigh_ref, out_ref, acc_ref):
    i = pl.program_id(0)                       # entity-row tile (parallel)
    k = pl.program_id(1)                       # streamed edge tile (reduction)
    tile_e = out_ref.shape[0]
    channel = out_ref.shape[1]
    tile_k = head_ref.shape[1]

    @pl.when(k == 0)
    def _init():
        acc_ref[...] = jnp.zeros_like(acc_ref)

    # One-hot scatter block for this (entity-tile, edge-tile) pair.
    ent_ids = i * tile_e + lax.broadcasted_iota(jnp.int32, (tile_e, tile_k), 0)
    onehot = (ent_ids == head_ref[...]).astype(jnp.float32)          # (T, K)

    # neigh carries a trailing ones column, so a single MXU matmul yields both
    # the per-entity sum (first `channel` cols) and the in-degree count (last).
    acc_ref[...] += jnp.dot(onehot, neigh_ref[...],
                            preferred_element_type=jnp.float32)      # (T, C+1)

    @pl.when(k == pl.num_programs(1) - 1)
    def _finalize():
        acc = acc_ref[...]
        count = acc[:, channel:channel + 1]
        inv = pl.reciprocal(jnp.maximum(count, 1.0), approx=False)
        out_ref[...] = acc[:, :channel] * inv                        # mean


def entity_aggregate(head, neigh, n_entities, *, tile_e=256, tile_k=1024):
    """scatter_mean(neigh, head, dim_size=n_entities, dim=0) on the MXU.

    head : (n_edges,) int32, neigh : (n_edges, channel) f32.
    tile_e=256 matches the v6e/v7x 256-wide MXU (128 also fine on v5e);
    tile_k=1024 keeps per-grid-step overhead (~0.35us) well amortized.
    """
    n_edges, channel = neigh.shape
    # Clamp tiles so small problems don't over-pad; keep (8,128) legality.
    tile_e = min(tile_e, _round_up(n_entities, 8))
    tile_k = min(tile_k, _round_up(n_edges, 128))
    n_ent_pad = _round_up(n_entities, tile_e)
    n_edge_pad = _round_up(n_edges, tile_k)

    # Augment with a ones column (fused count) and pad the edge axis.  Padded
    # edges get head id n_ent_pad (never matches a real entity row) and zero
    # payload, so they contribute nothing to sum or count.
    neigh_aug = jnp.concatenate(
        [neigh, jnp.ones((n_edges, 1), jnp.float32)], axis=1)
    neigh_aug = jnp.pad(neigh_aug, ((0, n_edge_pad - n_edges), (0, 0)))
    head_pad = jnp.pad(head.astype(jnp.int32).reshape(1, -1),
                       ((0, 0), (0, n_edge_pad - n_edges)),
                       constant_values=n_ent_pad)

    out = pl.pallas_call(
        _entity_agg_kernel,
        out_shape=jax.ShapeDtypeStruct((n_ent_pad, channel), jnp.float32),
        grid=(n_ent_pad // tile_e, n_edge_pad // tile_k),
        in_specs=[
            pl.BlockSpec((1, tile_k), lambda i, k: (0, k)),            # head
            pl.BlockSpec((tile_k, channel + 1), lambda i, k: (k, 0)),  # neigh+1
        ],
        out_specs=pl.BlockSpec((tile_e, channel), lambda i, k: (i, 0)),
        scratch_shapes=[pltpu.VMEM((tile_e, channel + 1), jnp.float32)],
        compiler_params=pltpu.CompilerParams(
            dimension_semantics=("parallel", "arbitrary")),
    )(head_pad, neigh_aug)
    return out[:n_entities]


# ----------------------------------------------------------------------------
# Kernel 2: user aggregation  (attention + tiled interact matmul + gating)
# ----------------------------------------------------------------------------
def _user_agg_kernel(user_ref, latent_ref, dw_ref, inter_ref, ent_ref,
                     out_ref, acc_ref):
    k = pl.program_id(1)                       # streamed entity (K) tile

    @pl.when(k == 0)
    def _init():
        acc_ref[...] = jnp.zeros_like(acc_ref)

    # user_agg = interact_mat @ entity_emb, entity axis streamed/accumulated.
    acc_ref[...] += jnp.dot(inter_ref[...], ent_ref[...],
                            preferred_element_type=jnp.float32)      # (U, C)

    @pl.when(k == pl.num_programs(1) - 1)
    def _finalize():
        # score = softmax(user_emb @ latent_emb.T, dim=1)
        s = lax.dot_general(user_ref[...], latent_ref[...],
                            (((1,), (1,)), ((), ())),
                            preferred_element_type=jnp.float32)      # (U, F)
        s = s - jnp.max(s, axis=1, keepdims=True)
        e = jnp.exp(s)
        score = e * pl.reciprocal(jnp.sum(e, axis=1, keepdims=True),
                                  approx=False)
        # (disen_weight * score).sum(dim=1)  ==  score @ disen_weight
        gate = jnp.dot(score, dw_ref[...],
                       preferred_element_type=jnp.float32)           # (U, C)
        # user_agg * gate + user_agg  ==  user_agg * (gate + 1)
        out_ref[...] = acc_ref[...] * (gate + 1.0)


def user_aggregate(user_emb, latent_emb, interact_dense, entity_emb, dw,
                   *, tile_u=256, tile_n=512):
    n_users, channel = user_emb.shape
    n_entities = entity_emb.shape[0]
    n_factors = latent_emb.shape[0]
    # Clamp tiles so small problems don't over-pad; keep (8,128) legality.
    tile_u = min(tile_u, _round_up(n_users, 8))
    tile_n = min(tile_n, _round_up(n_entities, 128))
    n_users_pad = _round_up(n_users, tile_u)
    n_ent_pad = _round_up(n_entities, tile_n)

    user_pad = jnp.pad(user_emb, ((0, n_users_pad - n_users), (0, 0)))
    inter_pad = jnp.pad(interact_dense,
                        ((0, n_users_pad - n_users),
                         (0, n_ent_pad - n_entities)))
    ent_pad = jnp.pad(entity_emb, ((0, n_ent_pad - n_entities), (0, 0)))

    out = pl.pallas_call(
        _user_agg_kernel,
        out_shape=jax.ShapeDtypeStruct((n_users_pad, channel), jnp.float32),
        grid=(n_users_pad // tile_u, n_ent_pad // tile_n),
        in_specs=[
            pl.BlockSpec((tile_u, channel), lambda i, k: (i, 0)),    # user
            pl.BlockSpec((n_factors, channel), lambda i, k: (0, 0)), # latent
            pl.BlockSpec((n_factors, channel), lambda i, k: (0, 0)), # dw
            pl.BlockSpec((tile_u, tile_n), lambda i, k: (i, k)),     # interact
            pl.BlockSpec((tile_n, channel), lambda i, k: (k, 0)),    # entity
        ],
        out_specs=pl.BlockSpec((tile_u, channel), lambda i, k: (i, 0)),
        scratch_shapes=[pltpu.VMEM((tile_u, channel), jnp.float32)],
        compiler_params=pltpu.CompilerParams(
            dimension_semantics=("parallel", "arbitrary")),
    )(user_pad, latent_emb, dw, inter_pad, ent_pad)
    return out[:n_users]


# ----------------------------------------------------------------------------
# Aggregator.forward (agg_mode == 'mean')
# ----------------------------------------------------------------------------
def aggregator_forward(entity_emb, user_emb, latent_emb, edge_index, edge_type,
                       interact_dense, weight, disen_weight_att,
                       agg_mode="mean"):
    if agg_mode != "mean":
        raise NotImplementedError  # TODO(synk): scatter_max branch not implemented
    n_entities = entity_emb.shape[0]
    head = edge_index[0].astype(jnp.int32)
    tail = edge_index[1]

    # Hoisted glue: gather + elementwise product, computed once per call.
    neigh = entity_emb[tail] * weight[edge_type - 1]                 # (E, C)
    entity_agg = entity_aggregate(head, neigh, n_entities)

    # Hoisted glue: constant w.r.t. users / entities, computed once per call.
    dw = jax.nn.softmax(disen_weight_att, axis=-1) @ weight          # (F, C)
    user_agg = user_aggregate(user_emb, latent_emb, interact_dense,
                              entity_emb, dw)
    return entity_agg, user_agg


# ----------------------------------------------------------------------------
# Pure-JAX reference (correctness check)
# ----------------------------------------------------------------------------
def aggregator_reference(entity_emb, user_emb, latent_emb, edge_index,
                         edge_type, interact_dense, weight, disen_weight_att):
    n_entities = entity_emb.shape[0]
    head = edge_index[0]
    tail = edge_index[1]
    neigh = entity_emb[tail] * weight[edge_type - 1]
    summ = jax.ops.segment_sum(neigh, head, num_segments=n_entities)
    cnt = jax.ops.segment_sum(jnp.ones(head.shape, jnp.float32), head,
                              num_segments=n_entities)
    entity_agg = summ / jnp.maximum(cnt[:, None], 1.0)

    score = jax.nn.softmax(user_emb @ latent_emb.T, axis=1)
    ua = interact_dense @ entity_emb
    dw = jax.nn.softmax(disen_weight_att, axis=-1) @ weight
    user_agg = ua * (score @ dw) + ua
    return entity_agg, user_agg


def xavier_uniform(key, shape):
    fan_out, fan_in = shape
    a = jnp.sqrt(6.0 / (fan_in + fan_out))
    return jax.random.uniform(key, shape, jnp.float32, -a, a)


if __name__ == "__main__":
    channel = 32
    n_users = 16
    n_entities = 24
    n_factors = 4
    n_relations = 5
    n_edges = 64

    key = jax.random.PRNGKey(0)
    keys = jax.random.split(key, 9)

    user_emb = jax.random.normal(keys[0], (n_users, channel), jnp.float32)
    entity_emb = jax.random.normal(keys[1], (n_entities, channel), jnp.float32)
    latent_emb = jax.random.normal(keys[2], (n_factors, channel), jnp.float32)

    head_ids = jax.random.randint(keys[3], (n_edges,), 0, n_entities)
    tail_ids = jax.random.randint(keys[4], (n_edges,), 0, n_entities)
    edge_index = jnp.stack([head_ids, tail_ids]).astype(jnp.int32)    # (2, E)
    edge_type = jax.random.randint(keys[5], (n_edges,), 1,
                                   n_relations).astype(jnp.int32)

    # Dense stand-in for the sparse user-item interaction matrix.
    interact_dense = (jax.random.uniform(keys[6], (n_users, n_entities))
                      < 0.25).astype(jnp.float32)

    weight = xavier_uniform(keys[7], (n_relations - 1, channel))
    disen_weight_att = xavier_uniform(keys[8], (n_factors, n_relations - 1))

    entity_agg, user_agg = aggregator_forward(
        entity_emb, user_emb, latent_emb, edge_index, edge_type,
        interact_dense, weight, disen_weight_att)
    jax.block_until_ready((entity_agg, user_agg))

    ref_entity, ref_user = aggregator_reference(
        entity_emb, user_emb, latent_emb, edge_index, edge_type,
        interact_dense, weight, disen_weight_att)

    assert entity_agg.shape == (n_entities, channel)
    assert user_agg.shape == (n_users, channel)
    assert jnp.allclose(entity_agg, ref_entity, atol=1e-4, rtol=1e-4)
    assert jnp.allclose(user_agg, ref_user, atol=1e-4, rtol=1e-4)
    print("KERNEL_OK")
</pallas_src>

<mosaic_0001>
module attributes {stable_mosaic.version = 11 : i64} {
  func.func @_entity_agg_kernel(%arg0: i32, %arg1: i32, %arg2: memref<1x128xi32, #tpu.memory_space<vmem>>, %arg3: memref<128x33xf32, #tpu.memory_space<vmem>>, %arg4: memref<24x32xf32, #tpu.memory_space<vmem>>, %arg5: memref<24x33xf32, #tpu.memory_space<vmem>>) attributes {dimension_semantics = [#tpu.dimension_semantics<parallel>, #tpu.dimension_semantics<arbitrary>], iteration_bounds = array<i64: 1, 1>, scalar_prefetch = 0 : i64, scratch_operands = 1 : i64, tpu.core_type = #tpu.core_type<tc>, window_params = [{transform_indices = @transform_0, window_bounds = array<i64: 1, 128>}, {transform_indices = @transform_1, window_bounds = array<i64: 128, 33>}, {transform_indices = @transform_2, window_bounds = array<i64: 24, 32>}]} {
    %c0_i32 = arith.constant 0 : i32
    %0 = arith.cmpi eq, %arg1, %c0_i32 : i32
    %1 = arith.extui %0 : i1 to i32
    %c0_i32_0 = arith.constant 0 : i32
    %2 = arith.cmpi ne, %1, %c0_i32_0 : i32
    scf.if %2 {
      %cst_10 = arith.constant 0.000000e+00 : f32
      %20 = vector.broadcast %cst_10 : f32 to vector<24x33xf32>
      %c0_11 = arith.constant 0 : index
      %c0_12 = arith.constant 0 : index
      %21 = vector.load %arg5[%c0_11, %c0_12] : memref<24x33xf32, #tpu.memory_space<vmem>>, vector<24x33xf32>
      tpu.vector_store %arg5[%c0_11, %c0_12], %20 {strides = array<i32>} : memref<24x33xf32, #tpu.memory_space<vmem>>, vector<24x33xf32>,
    } else {
    }
    %c24_i32 = arith.constant 24 : i32
    %3 = arith.muli %arg0, %c24_i32 : i32
    %4 = tpu.iota {dimensions = array<i32: 0>} : vector<24x128xi32>
    %5 = vector.broadcast %3 : i32 to vector<24x128xi32>
    %6 = arith.addi %5, %4 : vector<24x128xi32>
    %c0 = arith.constant 0 : index
    %c0_1 = arith.constant 0 : index
    %7 = vector.load %arg2[%c0, %c0_1] : memref<1x128xi32, #tpu.memory_space<vmem>>, vector<1x128xi32>
    %8 = vector.broadcast %7 : vector<1x128xi32> to vector<24x128xi32>
    %9 = arith.cmpi eq, %6, %8 : vector<24x128xi32>
    %10 = arith.extui %9 : vector<24x128xi1> to vector<24x128xi32>
    %11 = arith.sitofp %10 : vector<24x128xi32> to vector<24x128xf32>
    %c0_2 = arith.constant 0 : index
    %c0_3 = arith.constant 0 : index
    %12 = vector.load %arg5[%c0_2, %c0_3] : memref<24x33xf32, #tpu.memory_space<vmem>>, vector<24x33xf32>
    %c0_4 = arith.constant 0 : index
    %c0_5 = arith.constant 0 : index
    %13 = vector.load %arg3[%c0_4, %c0_5] : memref<128x33xf32, #tpu.memory_space<vmem>>, vector<128x33xf32>
    %cst = arith.constant dense<0.000000e+00> : vector<24x33xf32>
    %14 = tpu.matmul %11, %13, %cst {dimension_numbers = #tpu.dot_dimension_numbers<[1], [0], [0], [1], [0, 0, 1, 1], [], []>} : vector<24x128xf32>, vector<128x33xf32>, vector<24x33xf32> -> vector<24x33xf32>
    %15 = arith.addf %12, %14 : vector<24x33xf32>
    %c0_6 = arith.constant 0 : index
    %c0_7 = arith.constant 0 : index
    %16 = vector.load %arg5[%c0_6, %c0_7] : memref<24x33xf32, #tpu.memory_space<vmem>>, vector<24x33xf32>
    tpu.vector_store %arg5[%c0_6, %c0_7], %15 {strides = array<i32>} : memref<24x33xf32, #tpu.memory_space<vmem>>, vector<24x33xf32>,
    %c0_i32_8 = arith.constant 0 : i32
    %17 = arith.cmpi eq, %arg1, %c0_i32_8 : i32
    %18 = arith.extui %17 : i1 to i32
    %c0_i32_9 = arith.constant 0 : i32
    %19 = arith.cmpi ne, %18, %c0_i32_9 : i32
    scf.if %19 {
      %c0_10 = arith.constant 0 : index
      %c0_11 = arith.constant 0 : index
      %20 = vector.load %arg5[%c0_10, %c0_11] : memref<24x33xf32, #tpu.memory_space<vmem>>, vector<24x33xf32>
      %21 = vector.extract_strided_slice %20 {offsets = [0, 32], sizes = [24, 1], strides = [1, 1]} : vector<24x33xf32> to vector<24x1xf32>
      %cst_12 = arith.constant 1.000000e+00 : f32
      %22 = vector.broadcast %cst_12 : f32 to vector<24x1xf32>
      %23 = arith.maximumf %21, %22 : vector<24x1xf32>
      %24 = tpu.reciprocal %23 : vector<24x1xf32> -> vector<24x1xf32>
      %25 = vector.extract_strided_slice %20 {offsets = [0, 0], sizes = [24, 32], strides = [1, 1]} : vector<24x33xf32> to vector<24x32xf32>
      %26 = vector.broadcast %24 : vector<24x1xf32> to vector<24x32xf32>
      %27 = arith.mulf %25, %26 : vector<24x32xf32>
      %c0_13 = arith.constant 0 : index
      %c0_14 = arith.constant 0 : index
      %28 = vector.load %arg4[%c0_13, %c0_14] : memref<24x32xf32, #tpu.memory_space<vmem>>, vector<24x32xf32>
      tpu.vector_store %arg4[%c0_13, %c0_14], %27 {strides = array<i32>} : memref<24x32xf32, #tpu.memory_space<vmem>>, vector<24x32xf32>,
    } else {
    }
    return
  }
  func.func @transform_0(%arg0: i32, %arg1: i32) -> (i32, i32) {
    %c0_i32 = arith.constant 0 : i32
    %c0_i32_0 = arith.constant 0 : i32
    return %c0_i32, %arg1 : i32, i32
  }
  func.func @transform_1(%arg0: i32, %arg1: i32) -> (i32, i32) {
    %c0_i32 = arith.constant 0 : i32
    %c0_i32_0 = arith.constant 0 : i32
    return %arg1, %c0_i32 : i32, i32
  }
  func.func @transform_2(%arg0: i32, %arg1: i32) -> (i32, i32) {
    %c0_i32 = arith.constant 0 : i32
    %c0_i32_0 = arith.constant 0 : i32
    return %arg0, %c0_i32 : i32, i32
  }
}

</mosaic_0001>

<llo_original>
// kernel: tpu_custom_call.1
$region0: #{tpu_custom_call.1}
  #allocation0 [shape = 'u32[]', space=smem, size = 0x4, offset = 0x4, fixed_abs, tag = 'smem constant byte address 0x4 - core index']
  #allocation1 [shape = 'u32[144,128]{1,0:T(1,128)}', space=vmem, size = 0x12000, scoped, tag = 'internal scratch']
  #allocation2 [shape = 'f32[24,33]{1,0:T(8,128)}', space=vmem, size = 0x3000, scoped, tag = 'scratch operand']
  %s0 = inlined_call_operand.vmem [shape: s32[1,128], index: 0, kind: input, shape index: {}]
  %s1 = inlined_call_operand.vmem [shape: f32[128,33], index: 1, kind: input, shape index: {}]
  %s2 = inlined_call_operand.hbm [shape: f32[24,32], index: 2, kind: output, shape index: {}]
  %s3 = sld [smem:[#allocation0]]
  $region26: #{tpu_custom_call.1} parent=0
    _
  %s5 = ssub.s32 1, %s3
  %s6 = scalar_select 0, %s5, %s3
  $region1: #{tpu_custom_call.1} parent=0
    #allocation3 [shape = 'u8[12288]{0}', space=vmem, size = 0x3000, scoped, tag = 'output window, operand 0, single buffered']
    #allocation4 [shape = 's32[1]{0}', space=sflag, size = 0x4, scoped, tag = 'scoped memory for tpu_custom_call.1']
    %7 = vsyncpa [#allocation4], 0
    // Predicated region
    $region2: #{tpu_custom_call.1} parent=1 // pred_check
      _
    $region3: #{tpu_custom_call.1} parent=1 // pred_check_branch
      %9 = sbr.rel (0) target = $region5
    $region4: #{tpu_custom_call.1} parent=1 // pred_region
      _
    $region5: #{tpu_custom_call.1} parent=1 // pred_fallthru
      _
    // Predicated region
    $region6: #{tpu_custom_call.1} parent=1 // pred_check
      _
    $region7: #{tpu_custom_call.1} parent=1 // pred_check_branch
      %11 = sbr.rel (0) target = $region9
    $region8: #{tpu_custom_call.1} parent=1 // pred_region
      _
    $region9: #{tpu_custom_call.1} parent=1 // pred_fallthru
      _
    %p12 = scmp.eq.s32.totalorder 0, 0
    // Predicated region
    $region10: #{tpu_custom_call.1} parent=1 // pred_check
      %p13 = pneg %p12
    $region11: #{tpu_custom_call.1} parent=1 // pred_check_branch
      %15 = sbr.rel (%p13) target = $region13
    $region12: #{tpu_custom_call.1} parent=1 // pred_region
      %vm16 = vcmask 269312
      %17 = vst.msk [vmem:[#allocation2] sm:$0xff] %vm16, 0.0
      %18 = vst.msk [vmem:[#allocation2 + $0x8] sm:$0xff] %vm16, 0.0
      %19 = vst.msk [vmem:[#allocation2 + $0x10] sm:$0xff] %vm16, 0.0
    $region13: #{tpu_custom_call.1} parent=1 // pred_fallthru
      _
    %s20 = smul.u32 0, 24
    %v21 = vlaneseq
    %v22 = vshrl.u32 %v21, 7
    %v23 = vadd.s32 %v22, 8
    %v24 = vadd.s32 %v22, 16
    %v25 = vstv %s20
    %v26 = vadd.s32 %v25, %v22
    %v27 = vadd.s32 %v25, %v23
    %v28 = vadd.s32 %v25, %v24
    %v29 = vld [vmem:[%s0] sm:$0x1]
    %v30 = vlaneseq
    %v31 = vshrl.u32 %v30, 7
    %v32 = vsub.s32 0, %v31
    %v33 = vrot.slane %v29, %v32
    %vm34 = vcmp.eq.s32.totalorder %v26, %v33
    %vm35 = vcmp.eq.s32.totalorder %v27, %v33
    %vm36 = vcmp.eq.s32.totalorder %v28, %v33
    %v37 = vsel %vm34, 1, 0
    %v38 = vsel %vm35, 1, 0
    %v39 = vsel %vm36, 1, 0
    %v40 = vcvt.s32.f32 %v37
    %v41 = vcvt.s32.f32 %v38
    %v42 = vcvt.s32.f32 %v39
    %v43 = vld [vmem:[#allocation2] sm:$0xff]
    %v44 = vld [vmem:[#allocation2 + $0x8] sm:$0xff]
    %v45 = vld [vmem:[#allocation2 + $0x10] sm:$0xff]
    %v46 = vld [vmem:[%s1] sm:$0xff]
    %v47 = vld [vmem:[%s1 + $0x8] sm:$0xff]
    %v48 = vld [vmem:[%s1 + $0x10] sm:$0xff]
    %v49 = vld [vmem:[%s1 + $0x18] sm:$0xff]
    %v50 = vld [vmem:[%s1 + $0x20] sm:$0xff]
    %v51 = vld [vmem:[%s1 + $0x28] sm:$0xff]
    %v52 = vld [vmem:[%s1 + $0x30] sm:$0xff]
    %v53 = vld [vmem:[%s1 + $0x38] sm:$0xff]
    %v54 = vld [vmem:[%s1 + $0x40] sm:$0xff]
    %v55 = vld [vmem:[%s1 + $0x48] sm:$0xff]
    %v56 = vld [vmem:[%s1 + $0x50] sm:$0xff]
    %v57 = vld [vmem:[%s1 + $0x58] sm:$0xff]
    %v58 = vld [vmem:[%s1 + $0x60] sm:$0xff]
    %v59 = vld [vmem:[%s1 + $0x68] sm:$0xff]
    %v60 = vld [vmem:[%s1 + $0x70] sm:$0xff]
    %v61 = vld [vmem:[%s1 + $0x78] sm:$0xff]
    %62 = vmatprep.subr.mxu0 0.0
    %63 = vmatpush1.msra.mxu0 %v46
    %64 = vmatprep.subr.mxu0 0.0
    %65 = vmatpush1.msra.mxu0 %v47
    %66 = vmatprep.subr.mxu0 0.0
    %67 = vmatpush1.msra.mxu0 %v48
    %68 = vmatprep.subr.mxu0 0.0
    %69 = vmatpush1.msra.mxu0 %v49
    %70 = vmatprep.subr.mxu0 0.0
    %71 = vmatpush1.msra.mxu0 %v50
    %72 = vmatprep.subr.mxu0 0.0
    %73 = vmatpush1.msra.mxu0 %v51
    %74 = vmatprep.subr.mxu0 0.0
    %75 = vmatpush1.msra.mxu0 %v52
    %76 = vmatprep.subr.mxu0 0.0
    %77 = vmatpush1.msra.mxu0 %v53
    %78 = vmatprep.subr.mxu0 0.0
    %79 = vmatpush1.msra.mxu0 %v54
    %80 = vmatprep.subr.mxu0 0.0
    %81 = vmatpush1.msra.mxu0 %v55
    %82 = vmatprep.subr.mxu0 0.0
    %83 = vmatpush1.msra.mxu0 %v56
    %84 = vmatprep.subr.mxu0 0.0
    %85 = vmatpush1.msra.mxu0 %v57
    %86 = vmatprep.subr.mxu0 0.0
    %87 = vmatpush1.msra.mxu0 %v58
    %88 = vmatprep.subr.mxu0 0.0
    %89 = vmatpush1.msra.mxu0 %v59
    %90 = vmatprep.subr.mxu0 0.0
    %91 = vmatpush1.msra.mxu0 %v60
    %92 = vmatprep.subr.mxu0 0.0
    %93 = vmatpush1.msra.mxu0 %v61
    %94 = vmatprep.subr.mxu0 0.0
    %95 = vmatpush1.msra.mxu0 0.0
    %96 = vmatprep.subr.mxu0 0.0
    %97 = vmatpush1.msra.mxu0 0.0
    %98 = vmatprep.subr.mxu0 0.0
    %99 = vmatpush1.msra.mxu0 0.0
    %100 = vmatprep.subr.mxu0 0.0
    %101 = vmatpush1.msra.mxu0 0.0
    %102 = vmatprep.subr.mxu0 0.0
    %103 = vmatpush1.msra.mxu0 0.0
    %104 = vmatprep.subr.mxu0 0.0
    %105 = vmatpush1.msra.mxu0 0.0
    %106 = vmatprep.subr.mxu0 0.0
    %107 = vmatpush1.msra.mxu0 0.0
    %108 = vmatprep.subr.mxu0 0.0
    %109 = vmatpush1.msra.mxu0 0.0
    %110 = vmatprep.subr.mxu0 0.0
    %111 = vmatpush1.msra.mxu0 0.0
    %112 = vmatprep.subr.mxu0 0.0
    %113 = vmatpush1.msra.mxu0 0.0
    %114 = vmatprep.subr.mxu0 0.0
    %115 = vmatpush1.msra.mxu0 0.0
    %116 = vmatprep.subr.mxu0 0.0
    %117 = vmatpush1.msra.mxu0 0.0
    %118 = vmatprep.subr.mxu0 0.0
    %119 = vmatpush1.msra.mxu0 0.0
    %120 = vmatprep.subr.mxu0 0.0
    %121 = vmatpush1.msra.mxu0 0.0
    %122 = vmatprep.subr.mxu0 0.0
    %123 = vmatpush1.msra.mxu0 0.0
    %124 = vmatprep.subr.mxu0 0.0
    %125 = vmatpush1.msra.mxu0 0.0
    %126 = vmatprep.mubr.f32.mxu0 0.0
    %127 = vmatmul.mubr.f32.gmra.mrb[0].mxu0 %v40
    %v128 = vpop.f32.mrb[0].mxu0
    %v129 = vadd.f32 0.0, %v128
    %v130 = vpop.f32.mrb[0].mxu0
    %131 = vmatprep.mubr.f32.mxu0 0.0
    %132 = vmatmul.mubr.f32.gmra.mrb[0].mxu0 %v41
    %v133 = vpop.f32.mrb[0].mxu0
    %v134 = vadd.f32 0.0, %v133
    %v135 = vpop.f32.mrb[0].mxu0
    %136 = vmatprep.mubr.f32.mxu0 0.0
    %137 = vmatmul.mubr.f32.gmra.mrb[0].mxu0 %v42
    %v138 = vpop.f32.mrb[0].mxu0
    %v139 = vadd.f32 0.0, %v138
    %v140 = vpop.f32.mrb[0].mxu0
    %141 = vdwg.mxu0
    %v142 = vadd.f32 %v43, %v129
    %v143 = vadd.f32 %v44, %v134
    %v144 = vadd.f32 %v45, %v139
    %vm145 = vcmask 269312
    %146 = vst.msk [vmem:[#allocation2] sm:$0xff] %vm145, %v142
    %147 = vst.msk [vmem:[#allocation2 + $0x8] sm:$0xff] %vm145, %v143
    %148 = vst.msk [vmem:[#allocation2 + $0x10] sm:$0xff] %vm145, %v144
    // Predicated region
    $region14: #{tpu_custom_call.1} parent=1 // pred_check
      %p149 = pneg %p12
    $region15: #{tpu_custom_call.1} parent=1 // pred_check_branch
      %151 = sbr.rel (%p149) target = $region17
    $region16: #{tpu_custom_call.1} parent=1 // pred_region
      %v152 = vld [vmem:[#allocation2] sm:$0xff]
      %v153 = vld [vmem:[#allocation2 + $0x8] sm:$0xff]
      %v154 = vld [vmem:[#allocation2 + $0x10] sm:$0xff]
      %v155 = vmax.f32 %v152, 1.0
      %v156 = vmax.f32 %v153, 1.0
      %v157 = vmax.f32 %v154, 1.0
      %v158 = vrcp.pop %v155
      %v159 = vrcp.pop %v156
      %v160 = vrcp.pop %v157
      %162 = vset.pattern.permute.xlu0 32
      %163 = vperm.xlu0 %162, %v158
      %v164 = vpop.permute.xlu0 %163
      %167 = vset.pattern.permute.xlu0 32
      %168 = vperm.xlu0 %167, %v159
      %v169 = vpop.permute.xlu0 %168
      %172 = vset.pattern.permute.xlu0 32
      %173 = vperm.xlu0 %172, %v160
      %v174 = vpop.permute.xlu0 %173
      %v176 = vmul.f32 %v152, %v164
      %v177 = vmul.f32 %v153, %v169
      %v178 = vmul.f32 %v154, %v174
      %vm179 = vcmask 261120
      %180 = vst.msk [vmem:[#allocation3] sm:$0xff] %vm179, %v176
      %181 = vst.msk [vmem:[#allocation3 + $0x8] sm:$0xff] %vm179, %v177
      %182 = vst.msk [vmem:[#allocation3 + $0x10] sm:$0xff] %vm179, %v178
    $region17: #{tpu_custom_call.1} parent=1 // pred_fallthru
      _
    // Predicated region
    $region18: #{tpu_custom_call.1} parent=1 // pred_check
      _
    $region19: #{tpu_custom_call.1} parent=1 // pred_check_branch
      %184 = sbr.rel (0) target = $region21
    $region20: #{tpu_custom_call.1} parent=1 // pred_region
      %s186 = ssub.s32 384, 384
      %187 = vsyncadd [#allocation4], %s186
      %s188 = sshll.u32 [#allocation3], 4
      %s189 = int_to_ptr.vmem [resolvable:$true] %s188
      %194 = dma.vmem_to_hbm [thread:$0]  %s189, 384, %s2, [#allocation4], 128, 128, 8
    $region21: #{tpu_custom_call.1} parent=1 // pred_fallthru
      _
    // Predicated region
    $region22: #{tpu_custom_call.1} parent=1 // pred_check
      _
    $region23: #{tpu_custom_call.1} parent=1 // pred_check_branch
      %196 = sbr.rel (0) target = $region25
    $region24: #{tpu_custom_call.1} parent=1 // pred_region
      %197 = dma.done [#allocation4], 384
    $region25: #{tpu_custom_call.1} parent=1 // pred_fallthru
      _
    %198 = vsyncpa [#allocation4], 1

</llo_original>
